<compile_context>
chip_gen: v7x
topology: tpu7x:2x2x1
jax: 0.10.0
libtpu: 0.0.40
codegen_flags: <defaults>
</compile_context>

<pallas_src>
import jax
import jax.numpy as jnp
from jax import lax
from jax.experimental import pallas as pl
from jax.experimental.pallas import tpu as pltpu

EMB_DIM = 32     # emb_dim
META_DIM = 16    # meta_dim
SEQ_LEN = 8      # history length (x has 2 + SEQ_LEN columns)
UID_ALL = 50
IID_ALL = 100

_TB_MAX = 512                    # max batch tile (rows per grid step)
_VMEM_LIMIT = 32 * 1024 * 1024   # covers v5e's 16 MiB scoped default; <= v7x physical


def _pad_rows(tab, mult=128):
    """Pad an embedding table to a multiple-of-128 row count (zero rows, never addressed)."""
    r = tab.shape[0]
    rp = pl.cdiv(r, mult) * mult
    if rp == r:
        return tab
    return jnp.pad(tab, ((0, rp - r), (0, 0)))


def _pick_tb(B, max_tb=_TB_MAX):
    """Largest tile <= max_tb that still gives >= 2 grid steps when B allows it
    (v7x shards the 'parallel' axis across its 2 TensorCores)."""
    half = pl.cdiv(B, 2)
    tb = pl.cdiv(half, 128) * 128
    return max(128, min(max_tb, tb))


# ----------------------------- GMF kernel -----------------------------

def _gmf_kernel(x_ref, utab_ref, itab_ref, w_ref, o_ref):
    # x_ref: (tb, 2) int32 [uid, iid]; utab/itab: (V, D) tables; w_ref: (1, D);
    # o_ref: (1, 1, tb) lane-dense scores.
    tb = x_ref.shape[0]
    vu = utab_ref.shape[0]
    vi = itab_ref.shape[0]
    f32 = jnp.float32

    uid = x_ref[:, 0:1]
    iid = x_ref[:, 1:2]

    # In-kernel embedding gather via one-hot x table MXU matmuls.
    oh_u = (lax.broadcasted_iota(jnp.int32, (tb, vu), 1) == uid).astype(f32)
    oh_i = (lax.broadcasted_iota(jnp.int32, (tb, vi), 1) == iid).astype(f32)
    u = jnp.dot(oh_u, utab_ref[...], preferred_element_type=f32)      # (tb, D)
    it = jnp.dot(oh_i, itab_ref[...], preferred_element_type=f32)     # (tb, D)

    z = u * it                                                        # (tb, D)  VPU
    # Final linear fused as a (1,D)x(D,tb) contraction -> lane-dense (1, tb) store.
    o_ref[0] = lax.dot_general(w_ref[...], z, (((1,), (1,)), ((), ())),
                               preferred_element_type=f32)            # (1, tb)


def gmf_score(x, uid_tab, iid_tab, lin_w):
    """GMFBase hot path: gather + (u*i) @ w, batch-tiled.  Returns (B,) scores."""
    B = x.shape[0]
    D = uid_tab.shape[1]
    tb = _pick_tb(B)
    g = pl.cdiv(B, tb)
    bp = g * tb

    ids = jnp.pad(x[:, :2].astype(jnp.int32), ((0, bp - B), (0, 0)))  # (Bp, 2)
    utab = _pad_rows(uid_tab)
    itab = _pad_rows(iid_tab)
    w_row = lin_w.T                                                   # (1, D)

    out = pl.pallas_call(
        _gmf_kernel,
        out_shape=jax.ShapeDtypeStruct((g, 1, tb), jnp.float32),
        grid=(g,),
        in_specs=[
            pl.BlockSpec((tb, 2), lambda b: (b, 0)),
            pl.BlockSpec(utab.shape, lambda b: (0, 0)),    # grid-invariant: fetched once
            pl.BlockSpec(itab.shape, lambda b: (0, 0)),
            pl.BlockSpec((1, D), lambda b: (0, 0)),
        ],
        out_specs=pl.BlockSpec((1, 1, tb), lambda b: (b, 0, 0)),
        compiler_params=pltpu.CompilerParams(
            dimension_semantics=("parallel",),
            vmem_limit_bytes=_VMEM_LIMIT),
    )(ids, utab, itab, w_row)
    # Padded rows carry id 0 (valid row) -> garbage scores, sliced off here.
    return out.reshape(g * tb)[:B]


# ----------------------------- MetaNet (meta_v1) kernel -----------------------------

def _meta_v1_kernel(ids_ref, seqf_ref, utab_ref, itab_ref, ttab_ref,
                    w1_ref, b1_ref, w2r_ref, wd1_ref, bd1_ref, wd2_ref, bd2_ref,
                    rmat_ref, gmat_ref, wlin_ref, o_ref):
    # One grid step = tb samples.
    # ids_ref : (tb, 2)     int32 [uid, iid]
    # seqf_ref: (tb*S, 1)   int32 history ids, b-major flat (row b*S+s)
    # utab/itab/ttab: (V, D) tables; w1/b1/w2r: event_K; wd1/bd1/wd2/bd2: decoder;
    # rmat: (D, D*D) lane-replication 0/1; gmat: (D*D, D) block-identity 0/1;
    # wlin: (1, D); o_ref: (1, 1, tb).
    tb = ids_ref.shape[0]
    S = seqf_ref.shape[0] // tb
    D = w1_ref.shape[0]
    vu = utab_ref.shape[0]
    vi = itab_ref.shape[0]
    vt = ttab_ref.shape[0]
    f32 = jnp.float32

    uid = ids_ref[:, 0:1]                                             # (tb, 1)
    iid = ids_ref[:, 1:2]                                             # (tb, 1)
    seqf = seqf_ref[...]                                              # (tb*S, 1)

    # ---- event_K MLP batched over all S history slots (MXU M-dim = tb*S) ----
    oh = (lax.broadcasted_iota(jnp.int32, (tb * S, vi), 1) == seqf).astype(f32)
    ufea = jnp.dot(oh, itab_ref[...], preferred_element_type=f32)     # (tb*S, D)
    h = jnp.maximum(
        jnp.dot(ufea, w1_ref[...], preferred_element_type=f32) + b1_ref[...],
        0.0)                                                          # (tb*S, D)
    ek = lax.dot_general(h, w2r_ref[...], (((1,), (1,)), ((), ())),
                         preferred_element_type=f32)                  # (tb*S, 1)

    # ---- masked softmax over the S history slots (sublane axis of (tb,S,1)) ----
    mask = (seqf == 0).astype(f32)                                    # (tb*S, 1)
    t = (ek - mask * 1e8).reshape(tb, S, 1)                           # free reshape
    t = t - jnp.max(t, axis=1, keepdims=True)
    e = jnp.exp(t)
    inv = pl.reciprocal(jnp.sum(e, axis=1, keepdims=True), approx=True)
    att = e * inv                                                     # (tb, S, 1)

    # ---- his = sum_s att_s * ufea_s  (reuse gathered activations) ----
    his = jnp.sum(att * ufea.reshape(tb, S, D), axis=1)               # (tb, D)

    # ---- decoder MLP: one (tb,16)x(16,D*D) matmul ----
    d1 = jnp.maximum(
        jnp.dot(his, wd1_ref[...], preferred_element_type=f32) + bd1_ref[...],
        0.0)                                                          # (tb, M)
    mp = jnp.dot(d1, wd2_ref[...], preferred_element_type=f32) + bd2_ref[...]  # (tb, D*D)

    # ---- gather pretrained source-domain user embedding ----
    oh_u = (lax.broadcasted_iota(jnp.int32, (tb, vu), 1) == uid).astype(f32)
    u = jnp.dot(oh_u, utab_ref[...], preferred_element_type=f32)      # (tb, D)

    # ---- per-sample bmm  u(1,D) @ map(D,D)  via replicate / collapse matmuls:
    #      uid_new[b,e] = sum_d u[b,d] * mp[b, d*D+e] = (((u @ R) * mp) @ G)[b,e] ----
    u_rep = jnp.dot(u, rmat_ref[...], preferred_element_type=f32)     # (tb, D*D)
    uid_new = jnp.dot(u_rep * mp, gmat_ref[...],
                      preferred_element_type=f32)                     # (tb, D)

    # ---- target item embedding gather + GMF score, lane-dense output ----
    oh_t = (lax.broadcasted_iota(jnp.int32, (tb, vt), 1) == iid).astype(f32)
    it = jnp.dot(oh_t, ttab_ref[...], preferred_element_type=f32)     # (tb, D)
    z = uid_new * it                                                  # (tb, D)
    o_ref[0] = lax.dot_general(wlin_ref[...], z, (((1,), (1,)), ((), ())),
                               preferred_element_type=f32)            # (1, tb)


def meta_v1_score(x, params):
    """train_meta_v1 / test_meta_v1 hot path (gathers fused in-kernel).  Returns (B,)."""
    B = x.shape[0]
    S = x.shape[1] - 2
    D = params['ek_w1'].shape[0]
    M = params['dec_w1'].shape[1]
    tb = _pick_tb(B)
    g = pl.cdiv(B, tb)
    bp = g * tb

    xp = jnp.pad(x.astype(jnp.int32), ((0, bp - B), (0, 0)))          # (Bp, 2+S)
    ids = xp[:, :2]                                                   # (Bp, 2)
    seqf = xp[:, 2:].reshape(bp * S, 1)                               # (Bp*S, 1), b-major

    utab = _pad_rows(params['pre_uid_emb'])
    itab = _pad_rows(params['pre_iid_emb'])
    ttab = _pad_rows(params['tgt_iid_emb'])

    ek_w2r = params['ek_w2'].T                                        # (1, D)
    wlin = params['tgt_lin_w'].T                                      # (1, D)

    # Fixed 0/1 matrices for the replicate / collapse matmul pair.
    c = jnp.arange(D * D)
    r_mat = (jnp.arange(D)[:, None] == (c[None, :] // D)).astype(jnp.float32)  # (D, D*D)
    g_mat = ((c[:, None] % D) == jnp.arange(D)[None, :]).astype(jnp.float32)   # (D*D, D)

    out = pl.pallas_call(
        _meta_v1_kernel,
        out_shape=jax.ShapeDtypeStruct((g, 1, tb), jnp.float32),
        grid=(g,),
        in_specs=[
            pl.BlockSpec((tb, 2), lambda b: (b, 0)),                  # [uid, iid]
            pl.BlockSpec((tb * S, 1), lambda b: (b, 0)),              # flat history ids
            pl.BlockSpec(utab.shape, lambda b: (0, 0)),               # pre uid table
            pl.BlockSpec(itab.shape, lambda b: (0, 0)),               # pre iid table
            pl.BlockSpec(ttab.shape, lambda b: (0, 0)),               # tgt iid table
            pl.BlockSpec((D, D), lambda b: (0, 0)),                   # event_K w1
            pl.BlockSpec((1, D), lambda b: (0, 0)),                   # event_K b1
            pl.BlockSpec((1, D), lambda b: (0, 0)),                   # event_K w2 (row)
            pl.BlockSpec((D, M), lambda b: (0, 0)),                   # decoder w1
            pl.BlockSpec((1, M), lambda b: (0, 0)),                   # decoder b1
            pl.BlockSpec((M, D * D), lambda b: (0, 0)),               # decoder w2
            pl.BlockSpec((1, D * D), lambda b: (0, 0)),               # decoder b2
            pl.BlockSpec((D, D * D), lambda b: (0, 0)),               # replicate matrix R
            pl.BlockSpec((D * D, D), lambda b: (0, 0)),               # collapse matrix G
            pl.BlockSpec((1, D), lambda b: (0, 0)),                   # tgt linear (row)
        ],
        out_specs=pl.BlockSpec((1, 1, tb), lambda b: (b, 0, 0)),
        compiler_params=pltpu.CompilerParams(
            dimension_semantics=("parallel",),
            vmem_limit_bytes=_VMEM_LIMIT),
    )(ids, seqf, utab, itab, ttab,
      params['ek_w1'], params['ek_b1'], ek_w2r,
      params['dec_w1'], params['dec_b1'], params['dec_w2'], params['dec_b2'],
      r_mat, g_mat, wlin)
    # Padded rows carry id 0 (valid row) -> garbage scores, sliced off here.
    return out.reshape(g * tb)[:B]


# ----------------------------- parameters / glue -----------------------------

def init_params(key, uid_all=UID_ALL, iid_all=IID_ALL,
                emb_dim=EMB_DIM, meta_dim=META_DIM):
    ks = iter(jax.random.split(key, 32))

    def nrm(shape, s=0.1):
        return jax.random.normal(next(ks), shape, jnp.float32) * s

    p = {}
    # src_model / tgt_model / aug_model : GMFBase
    for name in ('src', 'tgt', 'aug'):
        p[f'{name}_uid_emb'] = nrm((uid_all, emb_dim))
        p[f'{name}_iid_emb'] = nrm((iid_all + 1, emb_dim))
        p[f'{name}_lin_w'] = nrm((emb_dim, 1))       # Linear(emb_dim, 1, bias=False)
    # src_pretrain_model (synthetic "pretrained" tables; only the ones meta_v1 needs)
    p['pre_uid_emb'] = nrm((uid_all, emb_dim))
    p['pre_iid_emb'] = nrm((iid_all + 1, emb_dim))
    # meta_net.event_K : Linear(D,D)+ReLU+Linear(D,1,bias=False)
    p['ek_w1'] = nrm((emb_dim, emb_dim))
    p['ek_b1'] = nrm((1, emb_dim))
    p['ek_w2'] = nrm((emb_dim, 1))
    # meta_net.decoder : Linear(D,meta)+ReLU+Linear(meta, D*D)
    p['dec_w1'] = nrm((emb_dim, meta_dim))
    p['dec_b1'] = nrm((1, meta_dim))
    p['dec_w2'] = nrm((meta_dim, emb_dim * emb_dim))
    p['dec_b2'] = nrm((1, emb_dim * emb_dim))
    return p


def _gmf_stage(params, x, which):
    return gmf_score(x, params[f'{which}_uid_emb'], params[f'{which}_iid_emb'],
                     params[f'{which}_lin_w'])


def gmf_based_model_forward(params, x, stage):
    x = x.astype(jnp.int32)
    if stage == 'train_src':
        return _gmf_stage(params, x, 'src')
    elif stage in ('train_tgt', 'test_tgt'):
        return _gmf_stage(params, x, 'tgt')
    elif stage in ('train_aug', 'test_aug'):
        return _gmf_stage(params, x, 'aug')
    elif stage in ('train_meta_v1', 'test_meta_v1'):
        return meta_v1_score(x, params)
    else:
        # TODO(synk): env_v6 / train_meta_v6 / train_map_v1 / test_map_v1 need the extra
        # pretrained uiu/uiciu/uibiu tables, the modulators and the mapping linear.
        raise NotImplementedError(stage)


# ----------------------------- plain-JAX reference -----------------------------

def ref_forward(params, x, stage):
    x = x.astype(jnp.int32)
    if stage in ('train_src', 'train_tgt', 'test_tgt', 'train_aug', 'test_aug'):
        which = {'train_src': 'src', 'train_tgt': 'tgt', 'test_tgt': 'tgt',
                 'train_aug': 'aug', 'test_aug': 'aug'}[stage]
        u = params[f'{which}_uid_emb'][x[:, 0]]
        i = params[f'{which}_iid_emb'][x[:, 1]]
        return ((u * i) @ params[f'{which}_lin_w'])[:, 0]
    elif stage in ('train_meta_v1', 'test_meta_v1'):
        D = EMB_DIM
        seq = x[:, 2:]
        iid_emb = params['tgt_iid_emb'][x[:, 1]]
        uid_src = params['pre_uid_emb'][x[:, 0]]
        ufea = params['pre_iid_emb'][seq]
        mask = (seq == 0).astype(jnp.float32)
        h = jax.nn.relu(ufea @ params['ek_w1'] + params['ek_b1'][0])
        ek = h @ params['ek_w2']
        t = ek - mask[:, :, None] * 1e8
        att = jax.nn.softmax(t, axis=1)
        his = jnp.sum(att * ufea, axis=1)
        d1 = jax.nn.relu(his @ params['dec_w1'] + params['dec_b1'][0])
        mp = (d1 @ params['dec_w2'] + params['dec_b2'][0]).reshape(-1, D, D)
        uid_new = jnp.einsum('bd,bde->be', uid_src, mp)
        return ((uid_new * iid_emb) @ params['tgt_lin_w'])[:, 0]
    else:
        raise NotImplementedError(stage)


# ----------------------------- main -----------------------------

if __name__ == "__main__":
    key = jax.random.PRNGKey(0)
    pkey, xkey = jax.random.split(key)
    params = init_params(pkey)

    def make_x(k, b):
        k1, k2, k3 = jax.random.split(k, 3)
        uid = jax.random.randint(k1, (b, 1), 0, UID_ALL)
        iid = jax.random.randint(k2, (b, 1), 0, IID_ALL + 1)
        seq = jax.random.randint(k3, (b, SEQ_LEN), 0, IID_ALL + 1)
        seq = seq.at[:, -2:].set(0)   # padding positions -> exercises the attention mask
        return jnp.concatenate([uid, iid, seq], axis=1).astype(jnp.int32)

    kx1, kx2 = jax.random.split(xkey)
    stages = ('train_src', 'train_tgt', 'test_aug', 'train_meta_v1', 'test_meta_v1')
    # B=4: small-shape check (single 128-row tile, padded).
    # B=300: multi-tile grid (tb=256 -> 2 parallel steps).
    for B, kx in ((4, kx1), (300, kx2)):
        x = make_x(kx, B)
        for stage in stages:
            out = jax.block_until_ready(gmf_based_model_forward(params, x, stage))
            ref = ref_forward(params, x, stage)
            assert out.shape == ref.shape == (B,), (stage, B, out.shape, ref.shape)
            err = float(jnp.max(jnp.abs(out - ref)))
            assert jnp.allclose(out, ref, rtol=1e-3, atol=1e-4), (stage, B, err)

    print("KERNEL_OK")
</pallas_src>

<mosaic_0001>
module attributes {stable_mosaic.version = 11 : i64} {
  func.func @_gmf_kernel(%arg0: i32, %arg1: memref<128x2xi32, #tpu.memory_space<vmem>>, %arg2: memref<128x32xf32, #tpu.memory_space<vmem>>, %arg3: memref<128x32xf32, #tpu.memory_space<vmem>>, %arg4: memref<1x32xf32, #tpu.memory_space<vmem>>, %arg5: memref<1x1x128xf32, #tpu.memory_space<vmem>>) attributes {dimension_semantics = [#tpu.dimension_semantics<parallel>], iteration_bounds = array<i64: 1>, scalar_prefetch = 0 : i64, scratch_operands = 0 : i64, tpu.core_type = #tpu.core_type<tc>, window_params = [{transform_indices = @transform_0, window_bounds = array<i64: 128, 2>}, {pipeline_mode = #tpu.pipeline_mode<synchronous>, transform_indices = @transform_1, window_bounds = array<i64: 128, 32>}, {pipeline_mode = #tpu.pipeline_mode<synchronous>, transform_indices = @transform_2, window_bounds = array<i64: 128, 32>}, {pipeline_mode = #tpu.pipeline_mode<synchronous>, transform_indices = @transform_3, window_bounds = array<i64: 1, 32>}, {transform_indices = @transform_4, window_bounds = array<i64: 1, 1, 128>}]} {
    %c0 = arith.constant 0 : index
    %c0_0 = arith.constant 0 : index
    %0 = vector.load %arg1[%c0, %c0_0] : memref<128x2xi32, #tpu.memory_space<vmem>>, vector<128x1xi32>
    %c0_1 = arith.constant 0 : index
    %c1 = arith.constant 1 : index
    %1 = vector.load %arg1[%c0_1, %c1] : memref<128x2xi32, #tpu.memory_space<vmem>>, vector<128x1xi32>
    %2 = tpu.iota {dimensions = array<i32: 1>} : vector<128x128xi32>
    %3 = vector.broadcast %0 : vector<128x1xi32> to vector<128x128xi32>
    %4 = arith.cmpi eq, %2, %3 : vector<128x128xi32>
    %5 = arith.extui %4 : vector<128x128xi1> to vector<128x128xi32>
    %6 = arith.sitofp %5 : vector<128x128xi32> to vector<128x128xf32>
    %7 = tpu.iota {dimensions = array<i32: 1>} : vector<128x128xi32>
    %8 = vector.broadcast %1 : vector<128x1xi32> to vector<128x128xi32>
    %9 = arith.cmpi eq, %7, %8 : vector<128x128xi32>
    %10 = arith.extui %9 : vector<128x128xi1> to vector<128x128xi32>
    %11 = arith.sitofp %10 : vector<128x128xi32> to vector<128x128xf32>
    %c0_2 = arith.constant 0 : index
    %c0_3 = arith.constant 0 : index
    %12 = vector.load %arg2[%c0_2, %c0_3] : memref<128x32xf32, #tpu.memory_space<vmem>>, vector<128x32xf32>
    %cst = arith.constant dense<0.000000e+00> : vector<128x32xf32>
    %13 = tpu.matmul %6, %12, %cst {dimension_numbers = #tpu.dot_dimension_numbers<[1], [0], [0], [1], [0, 0, 1, 1], [], []>} : vector<128x128xf32>, vector<128x32xf32>, vector<128x32xf32> -> vector<128x32xf32>
    %c0_4 = arith.constant 0 : index
    %c0_5 = arith.constant 0 : index
    %14 = vector.load %arg3[%c0_4, %c0_5] : memref<128x32xf32, #tpu.memory_space<vmem>>, vector<128x32xf32>
    %cst_6 = arith.constant dense<0.000000e+00> : vector<128x32xf32>
    %15 = tpu.matmul %11, %14, %cst_6 {dimension_numbers = #tpu.dot_dimension_numbers<[1], [0], [0], [1], [0, 0, 1, 1], [], []>} : vector<128x128xf32>, vector<128x32xf32>, vector<128x32xf32> -> vector<128x32xf32>
    %16 = arith.mulf %13, %15 : vector<128x32xf32>
    %c0_7 = arith.constant 0 : index
    %c0_8 = arith.constant 0 : index
    %17 = vector.load %arg4[%c0_7, %c0_8] : memref<1x32xf32, #tpu.memory_space<vmem>>, vector<1x32xf32>
    %cst_9 = arith.constant dense<0.000000e+00> : vector<1x128xf32>
    %18 = tpu.matmul %17, %16, %cst_9 {dimension_numbers = #tpu.dot_dimension_numbers<[1], [1], [0], [0], [0, 0, 1, 0], [], []>} : vector<1x32xf32>, vector<128x32xf32>, vector<1x128xf32> -> vector<1x128xf32>
    %c0_10 = arith.constant 0 : index
    %c0_11 = arith.constant 0 : index
    %c0_12 = arith.constant 0 : index
    %19 = vector.load %arg5[%c0_10, %c0_11, %c0_12] : memref<1x1x128xf32, #tpu.memory_space<vmem>>, vector<1x1x128xf32>
    %20 = vector.shape_cast %19 : vector<1x1x128xf32> to vector<1x128xf32>
    %21 = vector.shape_cast %18 : vector<1x128xf32> to vector<1x1x128xf32>
    tpu.vector_store %arg5[%c0_10, %c0_11, %c0_12], %21 {strides = array<i32>} : memref<1x1x128xf32, #tpu.memory_space<vmem>>, vector<1x1x128xf32>,
    return
  }
  func.func @transform_0(%arg0: i32) -> (i32, i32) {
    %c0_i32 = arith.constant 0 : i32
    %c0_i32_0 = arith.constant 0 : i32
    return %arg0, %c0_i32 : i32, i32
  }
  func.func @transform_1(%arg0: i32) -> (i32, i32) {
    %c0_i32 = arith.constant 0 : i32
    %c0_i32_0 = arith.constant 0 : i32
    %c0_i32_1 = arith.constant 0 : i32
    return %c0_i32, %c0_i32_0 : i32, i32
  }
  func.func @transform_2(%arg0: i32) -> (i32, i32) {
    %c0_i32 = arith.constant 0 : i32
    %c0_i32_0 = arith.constant 0 : i32
    %c0_i32_1 = arith.constant 0 : i32
    return %c0_i32, %c0_i32_0 : i32, i32
  }
  func.func @transform_3(%arg0: i32) -> (i32, i32) {
    %c0_i32 = arith.constant 0 : i32
    %c0_i32_0 = arith.constant 0 : i32
    %c0_i32_1 = arith.constant 0 : i32
    return %c0_i32, %c0_i32_0 : i32, i32
  }
  func.func @transform_4(%arg0: i32) -> (i32, i32, i32) {
    %c0_i32 = arith.constant 0 : i32
    %c0_i32_0 = arith.constant 0 : i32
    %c0_i32_1 = arith.constant 0 : i32
    return %arg0, %c0_i32, %c0_i32_0 : i32, i32, i32
  }
}

</mosaic_0001>

<llo_original>
// kernel: tpu_custom_call.1
$region0: #{tpu_custom_call.1}
  #allocation0 [shape = 'u32[]', space=smem, size = 0x4, offset = 0x4, fixed_abs, tag = 'smem constant byte address 0x4 - core index']
  #allocation1 [shape = 'u32[144,128]{1,0:T(1,128)}', space=vmem, size = 0x12000, scoped, tag = 'internal scratch']
  %s0 = inlined_call_operand.vmem [shape: s32[128,2], index: 0, kind: input, shape index: {}]
  %s1 = inlined_call_operand.vmem [shape: f32[128,32], index: 1, kind: input, shape index: {}]
  %s2 = inlined_call_operand.vmem [shape: f32[128,32], index: 2, kind: input, shape index: {}]
  %s3 = inlined_call_operand.vmem [shape: f32[1,32], index: 3, kind: input, shape index: {}]
  %s4 = inlined_call_operand.hbm [shape: f32[1,1,128], index: 4, kind: output, shape index: {}]
  %s5 = sld [smem:[#allocation0]]
  $region26: #{tpu_custom_call.1} parent=0
    _
  %s7 = ssub.s32 1, %s5
  %s8 = scalar_select 0, %s7, %s5
  $region1: #{tpu_custom_call.1} parent=0
    #allocation2 [shape = 'u8[512]{0}', space=vmem, size = 0x400, scoped, tag = 'output window, operand 0, single buffered']
    #allocation3 [shape = 's32[1]{0}', space=sflag, size = 0x4, scoped, tag = 'scoped memory for tpu_custom_call.1']
    %9 = vsyncpa [#allocation3], 0
    // Predicated region
    $region2: #{tpu_custom_call.1} parent=1 // pred_check
      _
    $region3: #{tpu_custom_call.1} parent=1 // pred_check_branch
      %11 = sbr.rel (0) target = $region5
    $region4: #{tpu_custom_call.1} parent=1 // pred_region
      _
    $region5: #{tpu_custom_call.1} parent=1 // pred_fallthru
      _
    // Predicated region
    $region6: #{tpu_custom_call.1} parent=1 // pred_check
      _
    $region7: #{tpu_custom_call.1} parent=1 // pred_check_branch
      %13 = sbr.rel (0) target = $region9
    $region8: #{tpu_custom_call.1} parent=1 // pred_region
      _
    $region9: #{tpu_custom_call.1} parent=1 // pred_fallthru
      _
    // Predicated region
    $region10: #{tpu_custom_call.1} parent=1 // pred_check
      _
    $region11: #{tpu_custom_call.1} parent=1 // pred_check_branch
      %15 = sbr.rel (0) target = $region13
    $region12: #{tpu_custom_call.1} parent=1 // pred_region
      _
    $region13: #{tpu_custom_call.1} parent=1 // pred_fallthru
      _
    // Predicated region
    $region14: #{tpu_custom_call.1} parent=1 // pred_check
      _
    $region15: #{tpu_custom_call.1} parent=1 // pred_check_branch
      %17 = sbr.rel (0) target = $region17
    $region16: #{tpu_custom_call.1} parent=1 // pred_region
      _
    $region17: #{tpu_custom_call.1} parent=1 // pred_fallthru
      _
    %v18 = vld [vmem:[%s0] sm:$0xff]
    %v19 = vld [vmem:[%s0 + $0x8] sm:$0xff]
    %v20 = vld [vmem:[%s0 + $0x10] sm:$0xff]
    %v21 = vld [vmem:[%s0 + $0x18] sm:$0xff]
    %v22 = vld [vmem:[%s0 + $0x20] sm:$0xff]
    %v23 = vld [vmem:[%s0 + $0x28] sm:$0xff]
    %v24 = vld [vmem:[%s0 + $0x30] sm:$0xff]
    %v25 = vld [vmem:[%s0 + $0x38] sm:$0xff]
    %v26 = vld [vmem:[%s0 + $0x40] sm:$0xff]
    %v27 = vld [vmem:[%s0 + $0x48] sm:$0xff]
    %v28 = vld [vmem:[%s0 + $0x50] sm:$0xff]
    %v29 = vld [vmem:[%s0 + $0x58] sm:$0xff]
    %v30 = vld [vmem:[%s0 + $0x60] sm:$0xff]
    %v31 = vld [vmem:[%s0 + $0x68] sm:$0xff]
    %v32 = vld [vmem:[%s0 + $0x70] sm:$0xff]
    %v33 = vld [vmem:[%s0 + $0x78] sm:$0xff]
    %v34 = vlaneseq
    %v35 = vand.u32 %v34, 127
    %36 = vset.pattern.permute.xlu0 0
    %37 = vperm.xlu0 %36, %v18
    %v38 = vpop.permute.xlu0 %37
    %39 = vset.pattern.permute.xlu0 0
    %40 = vperm.xlu0 %39, %v19
    %v41 = vpop.permute.xlu0 %40
    %42 = vset.pattern.permute.xlu0 0
    %43 = vperm.xlu0 %42, %v20
    %v44 = vpop.permute.xlu0 %43
    %45 = vset.pattern.permute.xlu0 0
    %46 = vperm.xlu0 %45, %v21
    %v47 = vpop.permute.xlu0 %46
    %48 = vset.pattern.permute.xlu0 0
    %49 = vperm.xlu0 %48, %v22
    %v50 = vpop.permute.xlu0 %49
    %51 = vset.pattern.permute.xlu0 0
    %52 = vperm.xlu0 %51, %v23
    %v53 = vpop.permute.xlu0 %52
    %54 = vset.pattern.permute.xlu0 0
    %55 = vperm.xlu0 %54, %v24
    %v56 = vpop.permute.xlu0 %55
    %57 = vset.pattern.permute.xlu0 0
    %58 = vperm.xlu0 %57, %v25
    %v59 = vpop.permute.xlu0 %58
    %60 = vset.pattern.permute.xlu0 0
    %61 = vperm.xlu0 %60, %v26
    %v62 = vpop.permute.xlu0 %61
    %63 = vset.pattern.permute.xlu0 0
    %64 = vperm.xlu0 %63, %v27
    %v65 = vpop.permute.xlu0 %64
    %66 = vset.pattern.permute.xlu0 0
    %67 = vperm.xlu0 %66, %v28
    %v68 = vpop.permute.xlu0 %67
    %69 = vset.pattern.permute.xlu0 0
    %70 = vperm.xlu0 %69, %v29
    %v71 = vpop.permute.xlu0 %70
    %72 = vset.pattern.permute.xlu0 0
    %73 = vperm.xlu0 %72, %v30
    %v74 = vpop.permute.xlu0 %73
    %75 = vset.pattern.permute.xlu0 0
    %76 = vperm.xlu0 %75, %v31
    %v77 = vpop.permute.xlu0 %76
    %78 = vset.pattern.permute.xlu0 0
    %79 = vperm.xlu0 %78, %v32
    %v80 = vpop.permute.xlu0 %79
    %81 = vset.pattern.permute.xlu0 0
    %82 = vperm.xlu0 %81, %v33
    %v83 = vpop.permute.xlu0 %82
    %vm84 = vcmp.eq.s32.totalorder %v35, %v38
    %vm85 = vcmp.eq.s32.totalorder %v35, %v41
    %vm86 = vcmp.eq.s32.totalorder %v35, %v44
    %vm87 = vcmp.eq.s32.totalorder %v35, %v47
    %vm88 = vcmp.eq.s32.totalorder %v35, %v50
    %vm89 = vcmp.eq.s32.totalorder %v35, %v53
    %vm90 = vcmp.eq.s32.totalorder %v35, %v56
    %vm91 = vcmp.eq.s32.totalorder %v35, %v59
    %vm92 = vcmp.eq.s32.totalorder %v35, %v62
    %vm93 = vcmp.eq.s32.totalorder %v35, %v65
    %vm94 = vcmp.eq.s32.totalorder %v35, %v68
    %vm95 = vcmp.eq.s32.totalorder %v35, %v71
    %vm96 = vcmp.eq.s32.totalorder %v35, %v74
    %vm97 = vcmp.eq.s32.totalorder %v35, %v77
    %vm98 = vcmp.eq.s32.totalorder %v35, %v80
    %vm99 = vcmp.eq.s32.totalorder %v35, %v83
    %v100 = vsel %vm84, 1, 0
    %v101 = vsel %vm85, 1, 0
    %v102 = vsel %vm86, 1, 0
    %v103 = vsel %vm87, 1, 0
    %v104 = vsel %vm88, 1, 0
    %v105 = vsel %vm89, 1, 0
    %v106 = vsel %vm90, 1, 0
    %v107 = vsel %vm91, 1, 0
    %v108 = vsel %vm92, 1, 0
    %v109 = vsel %vm93, 1, 0
    %v110 = vsel %vm94, 1, 0
    %v111 = vsel %vm95, 1, 0
    %v112 = vsel %vm96, 1, 0
    %v113 = vsel %vm97, 1, 0
    %v114 = vsel %vm98, 1, 0
    %v115 = vsel %vm99, 1, 0
    %v116 = vcvt.s32.f32 %v100
    %v117 = vcvt.s32.f32 %v101
    %v118 = vcvt.s32.f32 %v102
    %v119 = vcvt.s32.f32 %v103
    %v120 = vcvt.s32.f32 %v104
    %v121 = vcvt.s32.f32 %v105
    %v122 = vcvt.s32.f32 %v106
    %v123 = vcvt.s32.f32 %v107
    %v124 = vcvt.s32.f32 %v108
    %v125 = vcvt.s32.f32 %v109
    %v126 = vcvt.s32.f32 %v110
    %v127 = vcvt.s32.f32 %v111
    %v128 = vcvt.s32.f32 %v112
    %v129 = vcvt.s32.f32 %v113
    %v130 = vcvt.s32.f32 %v114
    %v131 = vcvt.s32.f32 %v115
    %132 = vset.pattern.permute.xlu0 1
    %133 = vperm.xlu0 %132, %v18
    %v134 = vpop.permute.xlu0 %133
    %135 = vset.pattern.permute.xlu0 1
    %136 = vperm.xlu0 %135, %v19
    %v137 = vpop.permute.xlu0 %136
    %138 = vset.pattern.permute.xlu0 1
    %139 = vperm.xlu0 %138, %v20
    %v140 = vpop.permute.xlu0 %139
    %141 = vset.pattern.permute.xlu0 1
    %142 = vperm.xlu0 %141, %v21
    %v143 = vpop.permute.xlu0 %142
    %144 = vset.pattern.permute.xlu0 1
    %145 = vperm.xlu0 %144, %v22
    %v146 = vpop.permute.xlu0 %145
    %147 = vset.pattern.permute.xlu0 1
    %148 = vperm.xlu0 %147, %v23
    %v149 = vpop.permute.xlu0 %148
    %150 = vset.pattern.permute.xlu0 1
    %151 = vperm.xlu0 %150, %v24
    %v152 = vpop.permute.xlu0 %151
    %153 = vset.pattern.permute.xlu0 1
    %154 = vperm.xlu0 %153, %v25
    %v155 = vpop.permute.xlu0 %154
    %156 = vset.pattern.permute.xlu0 1
    %157 = vperm.xlu0 %156, %v26
    %v158 = vpop.permute.xlu0 %157
    %159 = vset.pattern.permute.xlu0 1
    %160 = vperm.xlu0 %159, %v27
    %v161 = vpop.permute.xlu0 %160
    %162 = vset.pattern.permute.xlu0 1
    %163 = vperm.xlu0 %162, %v28
    %v164 = vpop.permute.xlu0 %163
    %165 = vset.pattern.permute.xlu0 1
    %166 = vperm.xlu0 %165, %v29
    %v167 = vpop.permute.xlu0 %166
    %168 = vset.pattern.permute.xlu0 1
    %169 = vperm.xlu0 %168, %v30
    %v170 = vpop.permute.xlu0 %169
    %171 = vset.pattern.permute.xlu0 1
    %172 = vperm.xlu0 %171, %v31
    %v173 = vpop.permute.xlu0 %172
    %174 = vset.pattern.permute.xlu0 1
    %175 = vperm.xlu0 %174, %v32
    %v176 = vpop.permute.xlu0 %175
    %177 = vset.pattern.permute.xlu0 1
    %178 = vperm.xlu0 %177, %v33
    %v179 = vpop.permute.xlu0 %178
    %vm180 = vcmp.eq.s32.totalorder %v35, %v134
    %vm181 = vcmp.eq.s32.totalorder %v35, %v137
    %vm182 = vcmp.eq.s32.totalorder %v35, %v140
    %vm183 = vcmp.eq.s32.totalorder %v35, %v143
    %vm184 = vcmp.eq.s32.totalorder %v35, %v146
    %vm185 = vcmp.eq.s32.totalorder %v35, %v149
    %vm186 = vcmp.eq.s32.totalorder %v35, %v152
    %vm187 = vcmp.eq.s32.totalorder %v35, %v155
    %vm188 = vcmp.eq.s32.totalorder %v35, %v158
    %vm189 = vcmp.eq.s32.totalorder %v35, %v161
    %vm190 = vcmp.eq.s32.totalorder %v35, %v164
    %vm191 = vcmp.eq.s32.totalorder %v35, %v167
    %vm192 = vcmp.eq.s32.totalorder %v35, %v170
    %vm193 = vcmp.eq.s32.totalorder %v35, %v173
    %vm194 = vcmp.eq.s32.totalorder %v35, %v176
    %vm195 = vcmp.eq.s32.totalorder %v35, %v179
    %v196 = vsel %vm180, 1, 0
    %v197 = vsel %vm181, 1, 0
    %v198 = vsel %vm182, 1, 0
    %v199 = vsel %vm183, 1, 0
    %v200 = vsel %vm184, 1, 0
    %v201 = vsel %vm185, 1, 0
    %v202 = vsel %vm186, 1, 0
    %v203 = vsel %vm187, 1, 0
    %v204 = vsel %vm188, 1, 0
    %v205 = vsel %vm189, 1, 0
    %v206 = vsel %vm190, 1, 0
    %v207 = vsel %vm191, 1, 0
    %v208 = vsel %vm192, 1, 0
    %v209 = vsel %vm193, 1, 0
    %v210 = vsel %vm194, 1, 0
    %v211 = vsel %vm195, 1, 0
    %v212 = vcvt.s32.f32 %v196
    %v213 = vcvt.s32.f32 %v197
    %v214 = vcvt.s32.f32 %v198
    %v215 = vcvt.s32.f32 %v199
    %v216 = vcvt.s32.f32 %v200
    %v217 = vcvt.s32.f32 %v201
    %v218 = vcvt.s32.f32 %v202
    %v219 = vcvt.s32.f32 %v203
    %v220 = vcvt.s32.f32 %v204
    %v221 = vcvt.s32.f32 %v205
    %v222 = vcvt.s32.f32 %v206
    %v223 = vcvt.s32.f32 %v207
    %v224 = vcvt.s32.f32 %v208
    %v225 = vcvt.s32.f32 %v209
    %v226 = vcvt.s32.f32 %v210
    %v227 = vcvt.s32.f32 %v211
    %v228 = vld [vmem:[%s1] sm:$0xff]
    %v229 = vld [vmem:[%s1 + $0x8] sm:$0xff]
    %v230 = vld [vmem:[%s1 + $0x10] sm:$0xff]
    %v231 = vld [vmem:[%s1 + $0x18] sm:$0xff]
    %v232 = vld [vmem:[%s1 + $0x20] sm:$0xff]
    %v233 = vld [vmem:[%s1 + $0x28] sm:$0xff]
    %v234 = vld [vmem:[%s1 + $0x30] sm:$0xff]
    %v235 = vld [vmem:[%s1 + $0x38] sm:$0xff]
    %v236 = vld [vmem:[%s1 + $0x40] sm:$0xff]
    %v237 = vld [vmem:[%s1 + $0x48] sm:$0xff]
    %v238 = vld [vmem:[%s1 + $0x50] sm:$0xff]
    %v239 = vld [vmem:[%s1 + $0x58] sm:$0xff]
    %v240 = vld [vmem:[%s1 + $0x60] sm:$0xff]
    %v241 = vld [vmem:[%s1 + $0x68] sm:$0xff]
    %v242 = vld [vmem:[%s1 + $0x70] sm:$0xff]
    %v243 = vld [vmem:[%s1 + $0x78] sm:$0xff]
    %244 = vmatprep.subr.mxu0 0.0
    %245 = vmatpush1.msra.mxu0 %v228
    %246 = vmatprep.subr.mxu0 0.0
    %247 = vmatpush1.msra.mxu0 %v229
    %248 = vmatprep.subr.mxu0 0.0
    %249 = vmatpush1.msra.mxu0 %v230
    %250 = vmatprep.subr.mxu0 0.0
    %251 = vmatpush1.msra.mxu0 %v231
    %252 = vmatprep.subr.mxu0 0.0
    %253 = vmatpush1.msra.mxu0 %v232
    %254 = vmatprep.subr.mxu0 0.0
    %255 = vmatpush1.msra.mxu0 %v233
    %256 = vmatprep.subr.mxu0 0.0
    %257 = vmatpush1.msra.mxu0 %v234
    %258 = vmatprep.subr.mxu0 0.0
    %259 = vmatpush1.msra.mxu0 %v235
    %260 = vmatprep.subr.mxu0 0.0
    %261 = vmatpush1.msra.mxu0 %v236
    %262 = vmatprep.subr.mxu0 0.0
    %263 = vmatpush1.msra.mxu0 %v237
    %264 = vmatprep.subr.mxu0 0.0
    %265 = vmatpush1.msra.mxu0 %v238
    %266 = vmatprep.subr.mxu0 0.0
    %267 = vmatpush1.msra.mxu0 %v239
    %268 = vmatprep.subr.mxu0 0.0
    %269 = vmatpush1.msra.mxu0 %v240
    %270 = vmatprep.subr.mxu0 0.0
    %271 = vmatpush1.msra.mxu0 %v241
    %272 = vmatprep.subr.mxu0 0.0
    %273 = vmatpush1.msra.mxu0 %v242
    %274 = vmatprep.subr.mxu0 0.0
    %275 = vmatpush1.msra.mxu0 %v243
    %276 = vmatprep.subr.mxu0 0.0
    %277 = vmatpush1.msra.mxu0 0.0
    %278 = vmatprep.subr.mxu0 0.0
    %279 = vmatpush1.msra.mxu0 0.0
    %280 = vmatprep.subr.mxu0 0.0
    %281 = vmatpush1.msra.mxu0 0.0
    %282 = vmatprep.subr.mxu0 0.0
    %283 = vmatpush1.msra.mxu0 0.0
    %284 = vmatprep.subr.mxu0 0.0
    %285 = vmatpush1.msra.mxu0 0.0
    %286 = vmatprep.subr.mxu0 0.0
    %287 = vmatpush1.msra.mxu0 0.0
    %288 = vmatprep.subr.mxu0 0.0
    %289 = vmatpush1.msra.mxu0 0.0
    %290 = vmatprep.subr.mxu0 0.0
    %291 = vmatpush1.msra.mxu0 0.0
    %292 = vmatprep.subr.mxu0 0.0
    %293 = vmatpush1.msra.mxu0 0.0
    %294 = vmatprep.subr.mxu0 0.0
    %295 = vmatpush1.msra.mxu0 0.0
    %296 = vmatprep.subr.mxu0 0.0
    %297 = vmatpush1.msra.mxu0 0.0
    %298 = vmatprep.subr.mxu0 0.0
    %299 = vmatpush1.msra.mxu0 0.0
    %300 = vmatprep.subr.mxu0 0.0
    %301 = vmatpush1.msra.mxu0 0.0
    %302 = vmatprep.subr.mxu0 0.0
    %303 = vmatpush1.msra.mxu0 0.0
    %304 = vmatprep.subr.mxu0 0.0
    %305 = vmatpush1.msra.mxu0 0.0
    %306 = vmatprep.subr.mxu0 0.0
    %307 = vmatpush1.msra.mxu0 0.0
    %308 = vmatprep.mubr.f32.mxu0 0.0
    %309 = vmatmul.mubr.f32.gmra.mrb[0].mxu0 %v116
    %v310 = vpop.f32.mrb[0].mxu0
    %v311 = vadd.f32 0.0, %v310
    %v312 = vpop.f32.mrb[0].mxu0
    %313 = vmatprep.mubr.f32.mxu0 0.0
    %314 = vmatmul.mubr.f32.gmra.mrb[0].mxu0 %v117
    %v315 = vpop.f32.mrb[0].mxu0
    %v316 = vadd.f32 0.0, %v315
    %v317 = vpop.f32.mrb[0].mxu0
    %318 = vmatprep.mubr.f32.mxu0 0.0
    %319 = vmatmul.mubr.f32.gmra.mrb[0].mxu0 %v118
    %v320 = vpop.f32.mrb[0].mxu0
    %v321 = vadd.f32 0.0, %v320
    %v322 = vpop.f32.mrb[0].mxu0
    %323 = vmatprep.mubr.f32.mxu0 0.0
    %324 = vmatmul.mubr.f32.gmra.mrb[0].mxu0 %v119
    %v325 = vpop.f32.mrb[0].mxu0
    %v326 = vadd.f32 0.0, %v325
    %v327 = vpop.f32.mrb[0].mxu0
    %328 = vmatprep.mubr.f32.mxu0 0.0
    %329 = vmatmul.mubr.f32.gmra.mrb[0].mxu0 %v120
    %v330 = vpop.f32.mrb[0].mxu0
    %v331 = vadd.f32 0.0, %v330
    %v332 = vpop.f32.mrb[0].mxu0
    %333 = vmatprep.mubr.f32.mxu0 0.0
    %334 = vmatmul.mubr.f32.gmra.mrb[0].mxu0 %v121
    %v335 = vpop.f32.mrb[0].mxu0
    %v336 = vadd.f32 0.0, %v335
    %v337 = vpop.f32.mrb[0].mxu0
    %338 = vmatprep.mubr.f32.mxu0 0.0
    %339 = vmatmul.mubr.f32.gmra.mrb[0].mxu0 %v122
    %v340 = vpop.f32.mrb[0].mxu0
    %v341 = vadd.f32 0.0, %v340
    %v342 = vpop.f32.mrb[0].mxu0
    %343 = vmatprep.mubr.f32.mxu0 0.0
    %344 = vmatmul.mubr.f32.gmra.mrb[0].mxu0 %v123
    %v345 = vpop.f32.mrb[0].mxu0
    %v346 = vadd.f32 0.0, %v345
    %v347 = vpop.f32.mrb[0].mxu0
    %348 = vmatprep.mubr.f32.mxu0 0.0
    %349 = vmatmul.mubr.f32.gmra.mrb[0].mxu0 %v124
    %v350 = vpop.f32.mrb[0].mxu0
    %v351 = vadd.f32 0.0, %v350
    %v352 = vpop.f32.mrb[0].mxu0
    %353 = vmatprep.mubr.f32.mxu0 0.0
    %354 = vmatmul.mubr.f32.gmra.mrb[0].mxu0 %v125
    %v355 = vpop.f32.mrb[0].mxu0
    %v356 = vadd.f32 0.0, %v355
    %v357 = vpop.f32.mrb[0].mxu0
    %358 = vmatprep.mubr.f32.mxu0 0.0
    %359 = vmatmul.mubr.f32.gmra.mrb[0].mxu0 %v126
    %v360 = vpop.f32.mrb[0].mxu0
    %v361 = vadd.f32 0.0, %v360
    %v362 = vpop.f32.mrb[0].mxu0
    %363 = vmatprep.mubr.f32.mxu0 0.0
    %364 = vmatmul.mubr.f32.gmra.mrb[0].mxu0 %v127
    %v365 = vpop.f32.mrb[0].mxu0
    %v366 = vadd.f32 0.0, %v365
    %v367 = vpop.f32.mrb[0].mxu0
    %368 = vmatprep.mubr.f32.mxu0 0.0
    %369 = vmatmul.mubr.f32.gmra.mrb[0].mxu0 %v128
    %v370 = vpop.f32.mrb[0].mxu0
    %v371 = vadd.f32 0.0, %v370
    %v372 = vpop.f32.mrb[0].mxu0
    %373 = vmatprep.mubr.f32.mxu0 0.0
    %374 = vmatmul.mubr.f32.gmra.mrb[0].mxu0 %v129
    %v375 = vpop.f32.mrb[0].mxu0
    %v376 = vadd.f32 0.0, %v375
    %v377 = vpop.f32.mrb[0].mxu0
    %378 = vmatprep.mubr.f32.mxu0 0.0
    %379 = vmatmul.mubr.f32.gmra.mrb[0].mxu0 %v130
    %v380 = vpop.f32.mrb[0].mxu0
    %v381 = vadd.f32 0.0, %v380
    %v382 = vpop.f32.mrb[0].mxu0
    %383 = vmatprep.mubr.f32.mxu0 0.0
    %384 = vmatmul.mubr.f32.gmra.mrb[0].mxu0 %v131
    %v385 = vpop.f32.mrb[0].mxu0
    %v386 = vadd.f32 0.0, %v385
    %v387 = vpop.f32.mrb[0].mxu0
    %388 = vdwg.mxu0
    %v389 = vld [vmem:[%s2] sm:$0xff]
    %v390 = vld [vmem:[%s2 + $0x8] sm:$0xff]
    %v391 = vld [vmem:[%s2 + $0x10] sm:$0xff]
    %v392 = vld [vmem:[%s2 + $0x18] sm:$0xff]
    %v393 = vld [vmem:[%s2 + $0x20] sm:$0xff]
    %v394 = vld [vmem:[%s2 + $0x28] sm:$0xff]
    %v395 = vld [vmem:[%s2 + $0x30] sm:$0xff]
    %v396 = vld [vmem:[%s2 + $0x38] sm:$0xff]
    %v397 = vld [vmem:[%s2 + $0x40] sm:$0xff]
    %v398 = vld [vmem:[%s2 + $0x48] sm:$0xff]
    %v399 = vld [vmem:[%s2 + $0x50] sm:$0xff]
    %v400 = vld [vmem:[%s2 + $0x58] sm:$0xff]
    %v401 = vld [vmem:[%s2 + $0x60] sm:$0xff]
    %v402 = vld [vmem:[%s2 + $0x68] sm:$0xff]
    %v403 = vld [vmem:[%s2 + $0x70] sm:$0xff]
    %v404 = vld [vmem:[%s2 + $0x78] sm:$0xff]
    %405 = vmatprep.subr.mxu0 0.0
    %406 = vmatpush1.msra.mxu0 %v389
    %407 = vmatprep.subr.mxu0 0.0
    %408 = vmatpush1.msra.mxu0 %v390
    %409 = vmatprep.subr.mxu0 0.0
    %410 = vmatpush1.msra.mxu0 %v391
    %411 = vmatprep.subr.mxu0 0.0
    %412 = vmatpush1.msra.mxu0 %v392
    %413 = vmatprep.subr.mxu0 0.0
    %414 = vmatpush1.msra.mxu0 %v393
    %415 = vmatprep.subr.mxu0 0.0
    %416 = vmatpush1.msra.mxu0 %v394
    %417 = vmatprep.subr.mxu0 0.0
    %418 = vmatpush1.msra.mxu0 %v395
    %419 = vmatprep.subr.mxu0 0.0
    %420 = vmatpush1.msra.mxu0 %v396
    %421 = vmatprep.subr.mxu0 0.0
    %422 = vmatpush1.msra.mxu0 %v397
    %423 = vmatprep.subr.mxu0 0.0
    %424 = vmatpush1.msra.mxu0 %v398
    %425 = vmatprep.subr.mxu0 0.0
    %426 = vmatpush1.msra.mxu0 %v399
    %427 = vmatprep.subr.mxu0 0.0
    %428 = vmatpush1.msra.mxu0 %v400
    %429 = vmatprep.subr.mxu0 0.0
    %430 = vmatpush1.msra.mxu0 %v401
    %431 = vmatprep.subr.mxu0 0.0
    %432 = vmatpush1.msra.mxu0 %v402
    %433 = vmatprep.subr.mxu0 0.0
    %434 = vmatpush1.msra.mxu0 %v403
    %435 = vmatprep.subr.mxu0 0.0
    %436 = vmatpush1.msra.mxu0 %v404
    %437 = vmatprep.subr.mxu0 0.0
    %438 = vmatpush1.msra.mxu0 0.0
    %439 = vmatprep.subr.mxu0 0.0
    %440 = vmatpush1.msra.mxu0 0.0
    %441 = vmatprep.subr.mxu0 0.0
    %442 = vmatpush1.msra.mxu0 0.0
    %443 = vmatprep.subr.mxu0 0.0
    %444 = vmatpush1.msra.mxu0 0.0
    %445 = vmatprep.subr.mxu0 0.0
    %446 = vmatpush1.msra.mxu0 0.0
    %447 = vmatprep.subr.mxu0 0.0
    %448 = vmatpush1.msra.mxu0 0.0
    %449 = vmatprep.subr.mxu0 0.0
    %450 = vmatpush1.msra.mxu0 0.0
    %451 = vmatprep.subr.mxu0 0.0
    %452 = vmatpush1.msra.mxu0 0.0
    %453 = vmatprep.subr.mxu0 0.0
    %454 = vmatpush1.msra.mxu0 0.0
    %455 = vmatprep.subr.mxu0 0.0
    %456 = vmatpush1.msra.mxu0 0.0
    %457 = vmatprep.subr.mxu0 0.0
    %458 = vmatpush1.msra.mxu0 0.0
    %459 = vmatprep.subr.mxu0 0.0
    %460 = vmatpush1.msra.mxu0 0.0
    %461 = vmatprep.subr.mxu0 0.0
    %462 = vmatpush1.msra.mxu0 0.0
    %463 = vmatprep.subr.mxu0 0.0
    %464 = vmatpush1.msra.mxu0 0.0
    %465 = vmatprep.subr.mxu0 0.0
    %466 = vmatpush1.msra.mxu0 0.0
    %467 = vmatprep.subr.mxu0 0.0
    %468 = vmatpush1.msra.mxu0 0.0
    %469 = vmatprep.mubr.f32.mxu0 0.0
    %470 = vmatmul.mubr.f32.gmra.mrb[0].mxu0 %v212
    %v471 = vpop.f32.mrb[0].mxu0
    %v472 = vadd.f32 0.0, %v471
    %v473 = vpop.f32.mrb[0].mxu0
    %474 = vmatprep.mubr.f32.mxu0 0.0
    %475 = vmatmul.mubr.f32.gmra.mrb[0].mxu0 %v213
    %v476 = vpop.f32.mrb[0].mxu0
    %v477 = vadd.f32 0.0, %v476
    %v478 = vpop.f32.mrb[0].mxu0
    %479 = vmatprep.mubr.f32.mxu0 0.0
    %480 = vmatmul.mubr.f32.gmra.mrb[0].mxu0 %v214
    %v481 = vpop.f32.mrb[0].mxu0
    %v482 = vadd.f32 0.0, %v481
    %v483 = vpop.f32.mrb[0].mxu0
    %484 = vmatprep.mubr.f32.mxu0 0.0
    %485 = vmatmul.mubr.f32.gmra.mrb[0].mxu0 %v215
    %v486 = vpop.f32.mrb[0].mxu0
    %v487 = vadd.f32 0.0, %v486
    %v488 = vpop.f32.mrb[0].mxu0
    %489 = vmatprep.mubr.f32.mxu0 0.0
    %490 = vmatmul.mubr.f32.gmra.mrb[0].mxu0 %v216
    %v491 = vpop.f32.mrb[0].mxu0
    %v492 = vadd.f32 0.0, %v491
    %v493 = vpop.f32.mrb[0].mxu0
    %494 = vmatprep.mubr.f32.mxu0 0.0
    %495 = vmatmul.mubr.f32.gmra.mrb[0].mxu0 %v217
    %v496 = vpop.f32.mrb[0].mxu0
    %v497 = vadd.f32 0.0, %v496
    %v498 = vpop.f32.mrb[0].mxu0
    %499 = vmatprep.mubr.f32.mxu0 0.0
    %500 = vmatmul.mubr.f32.gmra.mrb[0].mxu0 %v218
    %v501 = vpop.f32.mrb[0].mxu0
    %v502 = vadd.f32 0.0, %v501
    %v503 = vpop.f32.mrb[0].mxu0
    %504 = vmatprep.mubr.f32.mxu0 0.0
    %505 = vmatmul.mubr.f32.gmra.mrb[0].mxu0 %v219
    %v506 = vpop.f32.mrb[0].mxu0
    %v507 = vadd.f32 0.0, %v506
    %v508 = vpop.f32.mrb[0].mxu0
    %509 = vmatprep.mubr.f32.mxu0 0.0
    %510 = vmatmul.mubr.f32.gmra.mrb[0].mxu0 %v220
    %v511 = vpop.f32.mrb[0].mxu0
    %v512 = vadd.f32 0.0, %v511
    %v513 = vpop.f32.mrb[0].mxu0
    %514 = vmatprep.mubr.f32.mxu0 0.0
    %515 = vmatmul.mubr.f32.gmra.mrb[0].mxu0 %v221
    %v516 = vpop.f32.mrb[0].mxu0
    %v517 = vadd.f32 0.0, %v516
    %v518 = vpop.f32.mrb[0].mxu0
    %519 = vmatprep.mubr.f32.mxu0 0.0
    %520 = vmatmul.mubr.f32.gmra.mrb[0].mxu0 %v222
    %v521 = vpop.f32.mrb[0].mxu0
    %v522 = vadd.f32 0.0, %v521
    %v523 = vpop.f32.mrb[0].mxu0
    %524 = vmatprep.mubr.f32.mxu0 0.0
    %525 = vmatmul.mubr.f32.gmra.mrb[0].mxu0 %v223
    %v526 = vpop.f32.mrb[0].mxu0
    %v527 = vadd.f32 0.0, %v526
    %v528 = vpop.f32.mrb[0].mxu0
    %529 = vmatprep.mubr.f32.mxu0 0.0
    %530 = vmatmul.mubr.f32.gmra.mrb[0].mxu0 %v224
    %v531 = vpop.f32.mrb[0].mxu0
    %v532 = vadd.f32 0.0, %v531
    %v533 = vpop.f32.mrb[0].mxu0
    %534 = vmatprep.mubr.f32.mxu0 0.0
    %535 = vmatmul.mubr.f32.gmra.mrb[0].mxu0 %v225
    %v536 = vpop.f32.mrb[0].mxu0
    %v537 = vadd.f32 0.0, %v536
    %v538 = vpop.f32.mrb[0].mxu0
    %539 = vmatprep.mubr.f32.mxu0 0.0
    %540 = vmatmul.mubr.f32.gmra.mrb[0].mxu0 %v226
    %v541 = vpop.f32.mrb[0].mxu0
    %v542 = vadd.f32 0.0, %v541
    %v543 = vpop.f32.mrb[0].mxu0
    %544 = vmatprep.mubr.f32.mxu0 0.0
    %545 = vmatmul.mubr.f32.gmra.mrb[0].mxu0 %v227
    %v546 = vpop.f32.mrb[0].mxu0
    %v547 = vadd.f32 0.0, %v546
    %v548 = vpop.f32.mrb[0].mxu0
    %549 = vdwg.mxu0
    %v550 = vmul.f32 %v311, %v472
    %v551 = vmul.f32 %v316, %v477
    %v552 = vmul.f32 %v321, %v482
    %v553 = vmul.f32 %v326, %v487
    %v554 = vmul.f32 %v331, %v492
    %v555 = vmul.f32 %v336, %v497
    %v556 = vmul.f32 %v341, %v502
    %v557 = vmul.f32 %v346, %v507
    %v558 = vmul.f32 %v351, %v512
    %v559 = vmul.f32 %v356, %v517
    %v560 = vmul.f32 %v361, %v522
    %v561 = vmul.f32 %v366, %v527
    %v562 = vmul.f32 %v371, %v532
    %v563 = vmul.f32 %v376, %v537
    %v564 = vmul.f32 %v381, %v542
    %v565 = vmul.f32 %v386, %v547
    %v566 = vld [vmem:[%s3] sm:$0x1]
    %vm567 = vcmask 261120
    %v569 = vsel %vm567, %v566, 0
    %v572 = vsel %vm567, %v550, 0
    %v575 = vsel %vm567, %v551, 0
    %v578 = vsel %vm567, %v552, 0
    %v581 = vsel %vm567, %v553, 0
    %v584 = vsel %vm567, %v554, 0
    %v587 = vsel %vm567, %v555, 0
    %v590 = vsel %vm567, %v556, 0
    %v593 = vsel %vm567, %v557, 0
    %v596 = vsel %vm567, %v558, 0
    %v599 = vsel %vm567, %v559, 0
    %v602 = vsel %vm567, %v560, 0
    %v605 = vsel %vm567, %v561, 0
    %v608 = vsel %vm567, %v562, 0
    %v611 = vsel %vm567, %v563, 0
    %v614 = vsel %vm567, %v564, 0
    %v617 = vsel %vm567, %v565, 0
    %619 = vmatprep.subr.mxu0 0.0
    %620 = vmatpush1.xpose.msra.mxu0 %v572
    %621 = vmatprep.subr.mxu0 0.0
    %622 = vmatpush1.xpose.msra.mxu0 %v575
    %623 = vmatprep.subr.mxu0 0.0
    %624 = vmatpush1.xpose.msra.mxu0 %v578
    %625 = vmatprep.subr.mxu0 0.0
    %626 = vmatpush1.xpose.msra.mxu0 %v581
    %627 = vmatprep.subr.mxu0 0.0
    %628 = vmatpush1.xpose.msra.mxu0 %v584
    %629 = vmatprep.subr.mxu0 0.0
    %630 = vmatpush1.xpose.msra.mxu0 %v587
    %631 = vmatprep.subr.mxu0 0.0
    %632 = vmatpush1.xpose.msra.mxu0 %v590
    %633 = vmatprep.subr.mxu0 0.0
    %634 = vmatpush1.xpose.msra.mxu0 %v593
    %635 = vmatprep.subr.mxu0 0.0
    %636 = vmatpush1.xpose.msra.mxu0 %v596
    %637 = vmatprep.subr.mxu0 0.0
    %638 = vmatpush1.xpose.msra.mxu0 %v599
    %639 = vmatprep.subr.mxu0 0.0
    %640 = vmatpush1.xpose.msra.mxu0 %v602
    %641 = vmatprep.subr.mxu0 0.0
    %642 = vmatpush1.xpose.msra.mxu0 %v605
    %643 = vmatprep.subr.mxu0 0.0
    %644 = vmatpush1.xpose.msra.mxu0 %v608
    %645 = vmatprep.subr.mxu0 0.0
    %646 = vmatpush1.xpose.msra.mxu0 %v611
    %647 = vmatprep.subr.mxu0 0.0
    %648 = vmatpush1.xpose.msra.mxu0 %v614
    %649 = vmatprep.subr.mxu0 0.0
    %650 = vmatpush1.xpose.msra.mxu0 %v617
    %651 = vmatprep.subr.mxu0 0.0
    %652 = vmatpush1.xpose.msra.mxu0 0.0
    %653 = vmatprep.subr.mxu0 0.0
    %654 = vmatpush1.xpose.msra.mxu0 0.0
    %655 = vmatprep.subr.mxu0 0.0
    %656 = vmatpush1.xpose.msra.mxu0 0.0
    %657 = vmatprep.subr.mxu0 0.0
    %658 = vmatpush1.xpose.msra.mxu0 0.0
    %659 = vmatprep.subr.mxu0 0.0
    %660 = vmatpush1.xpose.msra.mxu0 0.0
    %661 = vmatprep.subr.mxu0 0.0
    %662 = vmatpush1.xpose.msra.mxu0 0.0
    %663 = vmatprep.subr.mxu0 0.0
    %664 = vmatpush1.xpose.msra.mxu0 0.0
    %665 = vmatprep.subr.mxu0 0.0
    %666 = vmatpush1.xpose.msra.mxu0 0.0
    %667 = vmatprep.subr.mxu0 0.0
    %668 = vmatpush1.xpose.msra.mxu0 0.0
    %669 = vmatprep.subr.mxu0 0.0
    %670 = vmatpush1.xpose.msra.mxu0 0.0
    %671 = vmatprep.subr.mxu0 0.0
    %672 = vmatpush1.xpose.msra.mxu0 0.0
    %673 = vmatprep.subr.mxu0 0.0
    %674 = vmatpush1.xpose.msra.mxu0 0.0
    %675 = vmatprep.subr.mxu0 0.0
    %676 = vmatpush1.xpose.msra.mxu0 0.0
    %677 = vmatprep.subr.mxu0 0.0
    %678 = vmatpush1.xpose.msra.mxu0 0.0
    %679 = vmatprep.subr.mxu0 0.0
    %680 = vmatpush1.xpose.msra.mxu0 0.0
    %681 = vmatprep.subr.mxu0 0.0
    %682 = vmatpush1.xpose.msra.mxu0 0.0
    %683 = vmatprep.mubr.f32.mxu0 0.0
    %684 = vmatmul.mubr.f32.gmra.mrb[0].mxu0 %v569
    %v685 = vpop.f32.mrb[0].mxu0
    %v686 = vadd.f32 0.0, %v685
    %v687 = vpop.f32.mrb[0].mxu0
    %688 = vdwg.mxu0
    %689 = vst [vmem:[#allocation2] sm:$0x1] %v686
    // Predicated region
    $region18: #{tpu_custom_call.1} parent=1 // pred_check
      _
    $region19: #{tpu_custom_call.1} parent=1 // pred_check_branch
      %691 = sbr.rel (0) target = $region21
    $region20: #{tpu_custom_call.1} parent=1 // pred_region
      %s693 = ssub.s32 16, 16
      %694 = vsyncadd [#allocation3], %s693
      %s696 = sshll.u32 [#allocation2], 4
      %s697 = int_to_ptr.vmem [resolvable:$true] %s696
      %699 = dma.vmem_to_hbm [thread:$0]  %s697, 16, %s4, [#allocation3]
    $region21: #{tpu_custom_call.1} parent=1 // pred_fallthru
      _
    // Predicated region
    $region22: #{tpu_custom_call.1} parent=1 // pred_check
      _
    $region23: #{tpu_custom_call.1} parent=1 // pred_check_branch
      %701 = sbr.rel (0) target = $region25
    $region24: #{tpu_custom_call.1} parent=1 // pred_region
      %702 = dma.done [#allocation3], 16
    $region25: #{tpu_custom_call.1} parent=1 // pred_fallthru
      _
    %703 = vsyncpa [#allocation3], 1

</llo_original>
